<compile_context>
chip_gen: v6e
topology: v6e:2x2x1
jax: 0.10.0
libtpu: 0.0.40
codegen_flags: <defaults>
</compile_context>

<pallas_src>
import functools

import jax
import jax.numpy as jnp
from jax.experimental import pallas as pl
from jax.experimental.pallas import tpu as pltpu


def _metanet_kernel(x_ref, w1_ref, b1_ref, w2_ref, b2_ref, mal_ref, bias_ref,
                    *, mm, compute_dtype):
    # x_ref:   (tile_b, emb_dim)
    # w1_ref:  (emb_dim, meta_dim)          b1_ref: (1, meta_dim)
    # w2_ref:  (meta_dim, mm + meta_dim)    b2_ref: (1, mm + meta_dim)
    # mal_ref: (tile_b, mm)                 bias_ref: (tile_b, meta_dim)
    x = x_ref[...]
    w1 = w1_ref[...]
    w2 = w2_ref[...]
    if compute_dtype is not None:
        x = x.astype(compute_dtype)
        w1 = w1.astype(compute_dtype)
        w2 = w2.astype(compute_dtype)

    # Layer 1 + ReLU (accumulate in f32, bias added in f32).
    h = jnp.dot(x, w1, preferred_element_type=jnp.float32) + b1_ref[...]
    h = jnp.maximum(h, 0.0)
    if compute_dtype is not None:
        h = h.astype(compute_dtype)

    # Layer 2: single fused matmul over the full 272-wide W2, then split at the
    # lane-aligned offset mm (=256 for meta_dim=16) before the two stores.
    out = jnp.dot(h, w2, preferred_element_type=jnp.float32) + b2_ref[...]
    mal_ref[...] = out[:, :mm].astype(mal_ref.dtype)
    bias_ref[...] = out[:, mm:].astype(bias_ref.dtype)


def metanet_flat_v1(emb_fea, w1, b1, w2, b2, meta_dim, *, tile_b=None,
                    out_dtype=None, compute_dtype=None):
    """Pallas implementation of MetaNetFlatV1.forward.

    emb_fea: (bs, emb_dim)
    w1: (emb_dim, meta_dim), b1: (meta_dim,)            -- (in, out) layout,
    w2: (meta_dim, meta_dim*(meta_dim+1)), b2: (...,)      i.e. transposed vs.
        PyTorch nn.Linear, so the kernel computes x @ W + b.
    out_dtype:     output dtype (default: emb_fea.dtype).  bf16 halves the
                   dominant output HBM traffic in this write-bound kernel.
    compute_dtype: optional MXU operand dtype (e.g. jnp.bfloat16 on v7x);
                   accumulation stays f32.
    returns: (mal_mat (bs, meta_dim, meta_dim), bias_mat (bs, meta_dim))
    """
    bs, emb_dim = emb_fea.shape
    mm = meta_dim * meta_dim
    out_dim = mm + meta_dim
    assert w1.shape == (emb_dim, meta_dim)
    assert b1.shape == (meta_dim,)
    assert w2.shape == (meta_dim, out_dim)
    assert b2.shape == (out_dim,)
    if out_dtype is None:
        out_dtype = emb_fea.dtype
    out_dtype = jnp.dtype(out_dtype)

    # --- row alignment (sublane packing) ------------------------------------
    # 8 rows for 32-bit, 16 for 16-bit (bf16 packs 2 rows/sublane), 32 for 8-bit.
    min_bytes = min(jnp.dtype(emb_fea.dtype).itemsize, out_dtype.itemsize)
    if compute_dtype is not None:
        min_bytes = min(min_bytes, jnp.dtype(compute_dtype).itemsize)
    row_align = (4 // max(1, min_bytes)) * 8

    # --- batch tiling --------------------------------------------------------
    bs_r = pl.cdiv(bs, row_align) * row_align
    if tile_b is None:
        tile_b = 4096
        # Keep >=4 grid steps on medium batches so v7x's two TensorCores each
        # get >=2 pipelined steps; no effect on large batches.
        cap = max(row_align, (bs_r // 4 // row_align) * row_align)
        tile_b = min(tile_b, cap)
    tile_b = int(tile_b)
    tile_b = max(row_align, min(tile_b, bs_r))
    tile_b = max(row_align, (tile_b // row_align) * row_align)

    # Partial final block is handled by Pallas (masked writeback) -- no padding.
    n_tiles = pl.cdiv(bs, tile_b)

    # --- scoped-VMEM budget (double-buffered inputs/outputs + weights) -------
    in_bytes = tile_b * emb_dim * jnp.dtype(emb_fea.dtype).itemsize
    out_bytes = tile_b * (mm + meta_dim) * out_dtype.itemsize
    w_bytes = ((w1.size + b1.size) * jnp.dtype(w1.dtype).itemsize
               + (w2.size + b2.size) * jnp.dtype(w2.dtype).itemsize)
    needed = 2 * (in_bytes + out_bytes + w_bytes)
    vmem_limit = int(min(64 * 2**20, max(32 * 2**20, int(needed * 1.5))))

    b1_2d = b1.reshape(1, meta_dim)
    b2_2d = b2.reshape(1, out_dim)

    kernel = functools.partial(_metanet_kernel, mm=mm, compute_dtype=compute_dtype)

    mal_out, bias_out = pl.pallas_call(
        kernel,
        out_shape=(
            jax.ShapeDtypeStruct((bs, mm), out_dtype),
            jax.ShapeDtypeStruct((bs, meta_dim), out_dtype),
        ),
        grid_spec=pltpu.PrefetchScalarGridSpec(
            num_scalar_prefetch=0,
            grid=(n_tiles,),
            in_specs=[
                pl.BlockSpec((tile_b, emb_dim), lambda i: (i, 0)),      # x
                pl.BlockSpec((emb_dim, meta_dim), lambda i: (0, 0)),    # W1
                pl.BlockSpec((1, meta_dim), lambda i: (0, 0)),          # b1
                pl.BlockSpec((meta_dim, out_dim), lambda i: (0, 0)),    # W2 (fused)
                pl.BlockSpec((1, out_dim), lambda i: (0, 0)),           # b2
            ],
            out_specs=(
                pl.BlockSpec((tile_b, mm), lambda i: (i, 0)),           # mal
                pl.BlockSpec((tile_b, meta_dim), lambda i: (i, 0)),     # bias
            ),
        ),
        compiler_params=pltpu.CompilerParams(
            dimension_semantics=("parallel",),
            vmem_limit_bytes=vmem_limit,
        ),
    )(emb_fea, w1, b1_2d, w2, b2_2d)

    # (bs, meta_dim^2) -> (bs, meta_dim, meta_dim): free metadata reshape.
    mal_mat = mal_out.reshape(-1, meta_dim, meta_dim)
    return mal_mat, bias_out


def _init_params(key, emb_dim, meta_dim):
    """Deterministic synthetic init (shapes match nn.Linear layers in __init__)."""
    out_dim = meta_dim * (meta_dim + 1)
    k1, k2, k3, k4 = jax.random.split(key, 4)
    # Store weights as (in, out) so kernel computes x @ W + b.
    w1 = jax.random.normal(k1, (emb_dim, meta_dim), jnp.float32) * (1.0 / jnp.sqrt(emb_dim))
    b1 = jax.random.normal(k2, (meta_dim,), jnp.float32) * 0.01
    w2 = jax.random.normal(k3, (meta_dim, out_dim), jnp.float32) * (1.0 / jnp.sqrt(meta_dim))
    b2 = jax.random.normal(k4, (out_dim,), jnp.float32) * 0.01
    return w1, b1, w2, b2


def _reference(emb_fea, w1, b1, w2, b2, meta_dim):
    h = jnp.maximum(emb_fea @ w1 + b1, 0.0)
    out = h @ w2 + b2
    mal = out[:, : meta_dim * meta_dim].reshape(-1, meta_dim, meta_dim)
    bias = out[:, meta_dim * meta_dim:]
    return mal, bias


if __name__ == "__main__":
    key = jax.random.PRNGKey(0)
    emb_dim, meta_dim = 32, 16

    k_x, k_p, k_x2, k_x3 = jax.random.split(key, 4)
    w1, b1, w2, b2 = _init_params(k_p, emb_dim, meta_dim)

    # --- case 1: tiny batch (grid of 1, block == full array), f32 exact -----
    bs = 8
    emb_fea = jax.random.normal(k_x, (bs, emb_dim), jnp.float32)
    mal_mat, bias_mat = metanet_flat_v1(emb_fea, w1, b1, w2, b2, meta_dim)
    jax.block_until_ready((mal_mat, bias_mat))
    mal_ref, bias_ref = _reference(emb_fea, w1, b1, w2, b2, meta_dim)
    assert mal_mat.shape == (bs, meta_dim, meta_dim)
    assert bias_mat.shape == (bs, meta_dim)
    assert jnp.allclose(mal_mat, mal_ref, atol=1e-5, rtol=1e-5)
    assert jnp.allclose(bias_mat, bias_ref, atol=1e-5, rtol=1e-5)

    # --- case 2: ragged batch, multi-step grid, partial final block ----------
    bs2 = 300  # not a multiple of tile_b -> 3 grid steps, masked final block
    emb_fea2 = jax.random.normal(k_x2, (bs2, emb_dim), jnp.float32)
    mal_mat2, bias_mat2 = metanet_flat_v1(
        emb_fea2, w1, b1, w2, b2, meta_dim, tile_b=128)
    jax.block_until_ready((mal_mat2, bias_mat2))
    mal_ref2, bias_ref2 = _reference(emb_fea2, w1, b1, w2, b2, meta_dim)
    assert mal_mat2.shape == (bs2, meta_dim, meta_dim)
    assert bias_mat2.shape == (bs2, meta_dim)
    assert jnp.allclose(mal_mat2, mal_ref2, atol=1e-5, rtol=1e-5)
    assert jnp.allclose(bias_mat2, bias_ref2, atol=1e-5, rtol=1e-5)

    # --- case 3: bf16 outputs + bf16 MXU operands (v7x fast path) ------------
    bs3 = 512
    emb_fea3 = jax.random.normal(k_x3, (bs3, emb_dim), jnp.float32)
    mal_mat3, bias_mat3 = metanet_flat_v1(
        emb_fea3, w1, b1, w2, b2, meta_dim, tile_b=256,
        out_dtype=jnp.bfloat16, compute_dtype=jnp.bfloat16)
    jax.block_until_ready((mal_mat3, bias_mat3))
    mal_ref3, bias_ref3 = _reference(emb_fea3, w1, b1, w2, b2, meta_dim)
    assert mal_mat3.dtype == jnp.bfloat16 and bias_mat3.dtype == jnp.bfloat16
    assert jnp.allclose(mal_mat3.astype(jnp.float32), mal_ref3, atol=1e-1, rtol=1e-1)
    assert jnp.allclose(bias_mat3.astype(jnp.float32), bias_ref3, atol=1e-1, rtol=1e-1)

    print("KERNEL_OK")
</pallas_src>

<mosaic_0001>
module attributes {stable_mosaic.version = 11 : i64} {
  func.func @_metanet_kernel(%arg0: i32, %arg1: memref<8x32xf32, #tpu.memory_space<vmem>>, %arg2: memref<32x16xf32, #tpu.memory_space<vmem>>, %arg3: memref<1x16xf32, #tpu.memory_space<vmem>>, %arg4: memref<16x272xf32, #tpu.memory_space<vmem>>, %arg5: memref<1x272xf32, #tpu.memory_space<vmem>>, %arg6: memref<8x256xf32, #tpu.memory_space<vmem>>, %arg7: memref<8x16xf32, #tpu.memory_space<vmem>>) attributes {dimension_semantics = [#tpu.dimension_semantics<parallel>], iteration_bounds = array<i64: 1>, scalar_prefetch = 0 : i64, scratch_operands = 0 : i64, tpu.core_type = #tpu.core_type<tc>, window_params = [{transform_indices = @transform_0, window_bounds = array<i64: 8, 32>}, {pipeline_mode = #tpu.pipeline_mode<synchronous>, transform_indices = @transform_1, window_bounds = array<i64: 32, 16>}, {pipeline_mode = #tpu.pipeline_mode<synchronous>, transform_indices = @transform_2, window_bounds = array<i64: 1, 16>}, {pipeline_mode = #tpu.pipeline_mode<synchronous>, transform_indices = @transform_3, window_bounds = array<i64: 16, 272>}, {pipeline_mode = #tpu.pipeline_mode<synchronous>, transform_indices = @transform_4, window_bounds = array<i64: 1, 272>}, {transform_indices = @transform_5, window_bounds = array<i64: 8, 256>}, {transform_indices = @transform_6, window_bounds = array<i64: 8, 16>}]} {
    %c0 = arith.constant 0 : index
    %c0_0 = arith.constant 0 : index
    %0 = vector.load %arg1[%c0, %c0_0] : memref<8x32xf32, #tpu.memory_space<vmem>>, vector<8x32xf32>
    %c0_1 = arith.constant 0 : index
    %c0_2 = arith.constant 0 : index
    %1 = vector.load %arg2[%c0_1, %c0_2] : memref<32x16xf32, #tpu.memory_space<vmem>>, vector<32x16xf32>
    %c0_3 = arith.constant 0 : index
    %c0_4 = arith.constant 0 : index
    %2 = vector.load %arg4[%c0_3, %c0_4] : memref<16x272xf32, #tpu.memory_space<vmem>>, vector<16x272xf32>
    %cst = arith.constant dense<0.000000e+00> : vector<8x16xf32>
    %3 = tpu.matmul %0, %1, %cst {dimension_numbers = #tpu.dot_dimension_numbers<[1], [0], [0], [1], [0, 0, 1, 1], [], []>} : vector<8x32xf32>, vector<32x16xf32>, vector<8x16xf32> -> vector<8x16xf32>
    %c0_5 = arith.constant 0 : index
    %c0_6 = arith.constant 0 : index
    %4 = vector.load %arg3[%c0_5, %c0_6] : memref<1x16xf32, #tpu.memory_space<vmem>>, vector<1x16xf32>
    %5 = vector.broadcast %4 : vector<1x16xf32> to vector<8x16xf32>
    %6 = arith.addf %3, %5 : vector<8x16xf32>
    %cst_7 = arith.constant 0.000000e+00 : f32
    %7 = vector.broadcast %cst_7 : f32 to vector<8x16xf32>
    %8 = arith.maximumf %6, %7 : vector<8x16xf32>
    %cst_8 = arith.constant dense<0.000000e+00> : vector<8x272xf32>
    %9 = tpu.matmul %8, %2, %cst_8 {dimension_numbers = #tpu.dot_dimension_numbers<[1], [0], [0], [1], [0, 0, 1, 1], [], []>} : vector<8x16xf32>, vector<16x272xf32>, vector<8x272xf32> -> vector<8x272xf32>
    %c0_9 = arith.constant 0 : index
    %c0_10 = arith.constant 0 : index
    %10 = vector.load %arg5[%c0_9, %c0_10] : memref<1x272xf32, #tpu.memory_space<vmem>>, vector<1x272xf32>
    %11 = vector.broadcast %10 : vector<1x272xf32> to vector<8x272xf32>
    %12 = arith.addf %9, %11 : vector<8x272xf32>
    %13 = vector.extract_strided_slice %12 {offsets = [0, 0], sizes = [8, 256], strides = [1, 1]} : vector<8x272xf32> to vector<8x256xf32>
    %c0_11 = arith.constant 0 : index
    %c0_12 = arith.constant 0 : index
    %14 = vector.load %arg6[%c0_11, %c0_12] : memref<8x256xf32, #tpu.memory_space<vmem>>, vector<8x256xf32>
    tpu.vector_store %arg6[%c0_11, %c0_12], %13 {strides = array<i32>} : memref<8x256xf32, #tpu.memory_space<vmem>>, vector<8x256xf32>,
    %15 = vector.extract_strided_slice %12 {offsets = [0, 256], sizes = [8, 16], strides = [1, 1]} : vector<8x272xf32> to vector<8x16xf32>
    %c0_13 = arith.constant 0 : index
    %c0_14 = arith.constant 0 : index
    %16 = vector.load %arg7[%c0_13, %c0_14] : memref<8x16xf32, #tpu.memory_space<vmem>>, vector<8x16xf32>
    tpu.vector_store %arg7[%c0_13, %c0_14], %15 {strides = array<i32>} : memref<8x16xf32, #tpu.memory_space<vmem>>, vector<8x16xf32>,
    return
  }
  func.func @transform_0(%arg0: i32) -> (i32, i32) {
    %c0_i32 = arith.constant 0 : i32
    %c0_i32_0 = arith.constant 0 : i32
    return %arg0, %c0_i32 : i32, i32
  }
  func.func @transform_1(%arg0: i32) -> (i32, i32) {
    %c0_i32 = arith.constant 0 : i32
    %c0_i32_0 = arith.constant 0 : i32
    %c0_i32_1 = arith.constant 0 : i32
    return %c0_i32, %c0_i32_0 : i32, i32
  }
  func.func @transform_2(%arg0: i32) -> (i32, i32) {
    %c0_i32 = arith.constant 0 : i32
    %c0_i32_0 = arith.constant 0 : i32
    %c0_i32_1 = arith.constant 0 : i32
    return %c0_i32, %c0_i32_0 : i32, i32
  }
  func.func @transform_3(%arg0: i32) -> (i32, i32) {
    %c0_i32 = arith.constant 0 : i32
    %c0_i32_0 = arith.constant 0 : i32
    %c0_i32_1 = arith.constant 0 : i32
    return %c0_i32, %c0_i32_0 : i32, i32
  }
  func.func @transform_4(%arg0: i32) -> (i32, i32) {
    %c0_i32 = arith.constant 0 : i32
    %c0_i32_0 = arith.constant 0 : i32
    %c0_i32_1 = arith.constant 0 : i32
    return %c0_i32, %c0_i32_0 : i32, i32
  }
  func.func @transform_5(%arg0: i32) -> (i32, i32) {
    %c0_i32 = arith.constant 0 : i32
    %c0_i32_0 = arith.constant 0 : i32
    return %arg0, %c0_i32 : i32, i32
  }
  func.func @transform_6(%arg0: i32) -> (i32, i32) {
    %c0_i32 = arith.constant 0 : i32
    %c0_i32_0 = arith.constant 0 : i32
    return %arg0, %c0_i32 : i32, i32
  }
}

</mosaic_0001>

<llo_original>
// kernel: tpu_custom_call.1
$region0: #{tpu_custom_call.1}
  #allocation0 [shape = 'u32[]', space=smem, size = 0x4, offset = 0x4, fixed_abs, tag = 'smem constant byte address 0x4 - core index']
  #allocation1 [shape = 'u32[144,128]{1,0:T(1,128)}', space=vmem, size = 0x12000, scoped, tag = 'internal scratch']
  %s0 = inlined_call_operand.hbm [shape: f32[8,32], index: 0, kind: input, shape index: {}]
  %s1 = inlined_call_operand.vmem [shape: f32[32,16], index: 1, kind: input, shape index: {}]
  %s2 = inlined_call_operand.vmem [shape: f32[1,16], index: 2, kind: input, shape index: {}]
  %s3 = inlined_call_operand.vmem [shape: f32[16,272], index: 3, kind: input, shape index: {}]
  %s4 = inlined_call_operand.vmem [shape: f32[1,272], index: 4, kind: input, shape index: {}]
  %s5 = inlined_call_operand.hbm [shape: f32[8,256], index: 5, kind: output, shape index: {0}]
  %s6 = inlined_call_operand.hbm [shape: f32[8,16], index: 6, kind: output, shape index: {1}]
  %7 = xla_tuple %s5, %s6
  %s8 = sld [smem:[#allocation0]]
  $region42: #{tpu_custom_call.1} parent=0
    _
  %s10 = ssub.s32 1, %s8
  %s11 = scalar_select 0, %s10, %s8
  $region1: #{tpu_custom_call.1} parent=0
    #allocation2 [shape = 'u8[4096]{0}', space=vmem, size = 0x1000, scoped, tag = 'input window, operand 0, single buffered']
    #allocation3 [shape = 's32[1]{0}', space=sflag, size = 0x4, scoped, tag = 'scoped memory for tpu_custom_call.1']
    #allocation4 [shape = 's32[1]{0}', space=sflag, size = 0x4, scoped, tag = 'scoped memory for tpu_custom_call.1']
    #allocation5 [shape = 'u8[8192]{0}', space=vmem, size = 0x2000, scoped, tag = 'output window, operand 0, single buffered']
    #allocation6 [shape = 'u8[4096]{0}', space=vmem, size = 0x1000, scoped, tag = 'output window, operand 1, single buffered']
    #allocation7 [shape = 's32[1]{0}', space=sflag, size = 0x4, scoped, tag = 'scoped memory for tpu_custom_call.1']
    %12 = vsyncpa [#allocation3], 0
    %13 = vsyncpa [#allocation4], 0
    %14 = vsyncpa [#allocation7], 0
    // Predicated region
    $region2: #{tpu_custom_call.1} parent=1 // pred_check
      _
    $region3: #{tpu_custom_call.1} parent=1 // pred_check_branch
      %16 = sbr.rel (0) target = $region5
    $region4: #{tpu_custom_call.1} parent=1 // pred_region
      %s18 = ssub.s32 128, 128
      %19 = vsyncadd [#allocation3], %s18
      %s21 = sshll.u32 [#allocation2], 4
      %s22 = int_to_ptr.vmem [resolvable:$true] %s21
      %24 = dma.hbm_to_vmem [thread:$0]  %s0, 128, %s22, [#allocation3]
    $region5: #{tpu_custom_call.1} parent=1 // pred_fallthru
      _
    // Predicated region
    $region6: #{tpu_custom_call.1} parent=1 // pred_check
      _
    $region7: #{tpu_custom_call.1} parent=1 // pred_check_branch
      %26 = sbr.rel (0) target = $region9
    $region8: #{tpu_custom_call.1} parent=1 // pred_region
      _
    $region9: #{tpu_custom_call.1} parent=1 // pred_fallthru
      _
    // Predicated region
    $region10: #{tpu_custom_call.1} parent=1 // pred_check
      _
    $region11: #{tpu_custom_call.1} parent=1 // pred_check_branch
      %28 = sbr.rel (0) target = $region13
    $region12: #{tpu_custom_call.1} parent=1 // pred_region
      _
    $region13: #{tpu_custom_call.1} parent=1 // pred_fallthru
      _
    // Predicated region
    $region14: #{tpu_custom_call.1} parent=1 // pred_check
      _
    $region15: #{tpu_custom_call.1} parent=1 // pred_check_branch
      %30 = sbr.rel (0) target = $region17
    $region16: #{tpu_custom_call.1} parent=1 // pred_region
      _
    $region17: #{tpu_custom_call.1} parent=1 // pred_fallthru
      _
    // Predicated region
    $region18: #{tpu_custom_call.1} parent=1 // pred_check
      _
    $region19: #{tpu_custom_call.1} parent=1 // pred_check_branch
      %32 = sbr.rel (0) target = $region21
    $region20: #{tpu_custom_call.1} parent=1 // pred_region
      _
    $region21: #{tpu_custom_call.1} parent=1 // pred_fallthru
      _
    // Predicated region
    $region22: #{tpu_custom_call.1} parent=1 // pred_check
      _
    $region23: #{tpu_custom_call.1} parent=1 // pred_check_branch
      %34 = sbr.rel (0) target = $region25
    $region24: #{tpu_custom_call.1} parent=1 // pred_region
      %35 = dma.done [#allocation3], 128
    $region25: #{tpu_custom_call.1} parent=1 // pred_fallthru
      _
    %v36 = vld [vmem:[#allocation2] sm:$0xff]
    %v37 = vld [vmem:[%s1] sm:$0xff]
    %v38 = vld [vmem:[%s1 + $0x8] sm:$0xff]
    %v39 = vld [vmem:[%s1 + $0x10] sm:$0xff]
    %v40 = vld [vmem:[%s1 + $0x18] sm:$0xff]
    %v41 = vld [vmem:[%s3] sm:$0xff]
    %v42 = vld [vmem:[%s3 + $0x8] sm:$0xff]
    %v43 = vld [vmem:[%s3 + $0x10] sm:$0xff]
    %v44 = vld [vmem:[%s3 + $0x18] sm:$0xff]
    %v45 = vld [vmem:[%s3 + $0x20] sm:$0xff]
    %v46 = vld [vmem:[%s3 + $0x28] sm:$0xff]
    %v47 = vld [vmem:[%s2] sm:$0x1]
    %v49 = vlaneseq
    %v50 = vshrl.u32 %v49, 7
    %v51 = vsub.s32 0, %v50
    %v52 = vrot.slane %v47, %v51
    %vm54 = vcmask 261120
    %v56 = vsel %vm54, %v36, 0
    %58 = vmatprep.subr.mxu0 0.0
    %59 = vmatpush1.msra.mxu0 0.0
    %60 = vmatprep.subr.mxu0 0.0
    %61 = vmatpush1.msra.mxu0 0.0
    %62 = vmatprep.subr.mxu0 0.0
    %63 = vmatpush1.msra.mxu0 0.0
    %64 = vmatprep.subr.mxu0 0.0
    %65 = vmatpush1.msra.mxu0 0.0
    %66 = vmatprep.subr.mxu0 0.0
    %67 = vmatpush1.msra.mxu0 0.0
    %68 = vmatprep.subr.mxu0 0.0
    %69 = vmatpush1.msra.mxu0 0.0
    %70 = vmatprep.subr.mxu0 0.0
    %71 = vmatpush1.msra.mxu0 0.0
    %72 = vmatprep.subr.mxu0 0.0
    %73 = vmatpush1.msra.mxu0 0.0
    %74 = vmatprep.subr.mxu0 0.0
    %75 = vmatpush1.msra.mxu0 0.0
    %76 = vmatprep.subr.mxu0 0.0
    %77 = vmatpush1.msra.mxu0 0.0
    %78 = vmatprep.subr.mxu0 0.0
    %79 = vmatpush1.msra.mxu0 0.0
    %80 = vmatprep.subr.mxu0 0.0
    %81 = vmatpush1.msra.mxu0 0.0
    %82 = vmatprep.subr.mxu0 0.0
    %83 = vmatpush1.msra.mxu0 %v40
    %84 = vmatprep.subr.mxu0 0.0
    %85 = vmatpush1.msra.mxu0 %v39
    %86 = vmatprep.subr.mxu0 0.0
    %87 = vmatpush1.msra.mxu0 %v38
    %88 = vmatprep.subr.mxu0 0.0
    %89 = vmatpush1.msra.mxu0 %v37
    %90 = vmatprep.subr.mxu0 0.0
    %91 = vmatpush2.msra.mxu0 0.0
    %92 = vmatprep.subr.mxu0 0.0
    %93 = vmatpush2.msra.mxu0 0.0
    %94 = vmatprep.subr.mxu0 0.0
    %95 = vmatpush2.msra.mxu0 0.0
    %96 = vmatprep.subr.mxu0 0.0
    %97 = vmatpush2.msra.mxu0 0.0
    %98 = vmatprep.subr.mxu0 0.0
    %99 = vmatpush2.msra.mxu0 0.0
    %100 = vmatprep.subr.mxu0 0.0
    %101 = vmatpush2.msra.mxu0 0.0
    %102 = vmatprep.subr.mxu0 0.0
    %103 = vmatpush2.msra.mxu0 0.0
    %104 = vmatprep.subr.mxu0 0.0
    %105 = vmatpush2.msra.mxu0 0.0
    %106 = vmatprep.subr.mxu0 0.0
    %107 = vmatpush2.msra.mxu0 0.0
    %108 = vmatprep.subr.mxu0 0.0
    %109 = vmatpush2.msra.mxu0 0.0
    %110 = vmatprep.subr.mxu0 0.0
    %111 = vmatpush2.msra.mxu0 0.0
    %112 = vmatprep.subr.mxu0 0.0
    %113 = vmatpush2.msra.mxu0 0.0
    %114 = vmatprep.subr.mxu0 0.0
    %115 = vmatpush2.msra.mxu0 0.0
    %116 = vmatprep.subr.mxu0 0.0
    %117 = vmatpush2.msra.mxu0 0.0
    %118 = vmatprep.subr.mxu0 0.0
    %119 = vmatpush2.msra.mxu0 0.0
    %120 = vmatprep.subr.mxu0 0.0
    %121 = vmatpush2.msra.mxu0 0.0
    %122 = vmatprep.mubr.f32.mxu0 0.0
    %123 = vmatmul.mubr.f32.gmra.mxu0 %v56
    %v124 = vpop.f32.mrf.mxu0
    %v125 = vadd.f32 %v52, %v124
    %v126 = vpop.f32.mrf.mxu0
    %127 = vdwg.mxu0
    %v128 = vmax.f32 %v125, 0.0
    %v129 = vld [vmem:[%s4] sm:$0x7]
    %v131 = vlaneseq
    %v132 = vshrl.u32 %v131, 7
    %v133 = vsub.s32 0, %v132
    %v134 = vrot.slane %v129, %v133
    %v135 = vlaneseq
    %v136 = vshrl.u32 %v135, 7
    %v137 = vsub.s32 1, %v136
    %v138 = vrot.slane %v129, %v137
    %v139 = vlaneseq
    %v140 = vshrl.u32 %v139, 7
    %v141 = vsub.s32 2, %v140
    %v142 = vrot.slane %v129, %v141
    %vm146 = vcmask 130048
    %v148 = vsel %vm146, %v128, 0
    %150 = vmatprep.subr.mxu0 0.0
    %151 = vmatpush1.msra.mxu0 0.0
    %152 = vmatprep.subr.mxu0 0.0
    %153 = vmatpush1.msra.mxu0 0.0
    %154 = vmatprep.subr.mxu0 0.0
    %155 = vmatpush1.msra.mxu0 0.0
    %156 = vmatprep.subr.mxu0 0.0
    %157 = vmatpush1.msra.mxu0 0.0
    %158 = vmatprep.subr.mxu0 0.0
    %159 = vmatpush1.msra.mxu0 0.0
    %160 = vmatprep.subr.mxu0 0.0
    %161 = vmatpush1.msra.mxu0 0.0
    %162 = vmatprep.subr.mxu0 0.0
    %163 = vmatpush1.msra.mxu0 0.0
    %164 = vmatprep.subr.mxu0 0.0
    %165 = vmatpush1.msra.mxu0 0.0
    %166 = vmatprep.subr.mxu0 0.0
    %167 = vmatpush1.msra.mxu0 0.0
    %168 = vmatprep.subr.mxu0 0.0
    %169 = vmatpush1.msra.mxu0 0.0
    %170 = vmatprep.subr.mxu0 0.0
    %171 = vmatpush1.msra.mxu0 0.0
    %172 = vmatprep.subr.mxu0 0.0
    %173 = vmatpush1.msra.mxu0 0.0
    %174 = vmatprep.subr.mxu0 0.0
    %175 = vmatpush1.msra.mxu0 0.0
    %176 = vmatprep.subr.mxu0 0.0
    %177 = vmatpush1.msra.mxu0 0.0
    %178 = vmatprep.subr.mxu0 %v45
    %179 = vmatpush1.msra.mxu0 %v44
    %180 = vmatprep.subr.mxu0 %v42
    %181 = vmatpush1.msra.mxu0 %v41
    %182 = vmatprep.subr.mxu0 0.0
    %183 = vmatpush2.msra.mxu0 0.0
    %184 = vmatprep.subr.mxu0 0.0
    %185 = vmatpush2.msra.mxu0 0.0
    %186 = vmatprep.subr.mxu0 0.0
    %187 = vmatpush2.msra.mxu0 0.0
    %188 = vmatprep.subr.mxu0 0.0
    %189 = vmatpush2.msra.mxu0 0.0
    %190 = vmatprep.subr.mxu0 0.0
    %191 = vmatpush2.msra.mxu0 0.0
    %192 = vmatprep.subr.mxu0 0.0
    %193 = vmatpush2.msra.mxu0 0.0
    %194 = vmatprep.subr.mxu0 0.0
    %195 = vmatpush2.msra.mxu0 0.0
    %196 = vmatprep.subr.mxu0 0.0
    %197 = vmatpush2.msra.mxu0 0.0
    %198 = vmatprep.subr.mxu0 0.0
    %199 = vmatpush2.msra.mxu0 0.0
    %200 = vmatprep.subr.mxu0 0.0
    %201 = vmatpush2.msra.mxu0 0.0
    %202 = vmatprep.subr.mxu0 0.0
    %203 = vmatpush2.msra.mxu0 0.0
    %204 = vmatprep.subr.mxu0 0.0
    %205 = vmatpush2.msra.mxu0 0.0
    %206 = vmatprep.subr.mxu0 0.0
    %207 = vmatpush2.msra.mxu0 0.0
    %208 = vmatprep.subr.mxu0 0.0
    %209 = vmatpush2.msra.mxu0 0.0
    %210 = vmatprep.subr.mxu0 0.0
    %211 = vmatpush2.msra.mxu0 0.0
    %212 = vmatprep.subr.mxu0 0.0
    %213 = vmatpush2.msra.mxu0 0.0
    %214 = vmatprep.mubr.f32.mxu0 0.0
    %215 = vmatmul.mubr.f32.gmra.mxu0 %v148
    %v216 = vpop.f32.mrf.mxu0
    %v217 = vadd.f32 %v134, %v216
    %v218 = vpop.f32.mrf.mxu0
    %v219 = vadd.f32 %v138, %v218
    %220 = vdwg.mxu0
    %221 = vmatprep.subr.mxu0 0.0
    %222 = vmatpush1.msra.mxu0 0.0
    %223 = vmatprep.subr.mxu0 0.0
    %224 = vmatpush1.msra.mxu0 0.0
    %225 = vmatprep.subr.mxu0 0.0
    %226 = vmatpush1.msra.mxu0 0.0
    %227 = vmatprep.subr.mxu0 0.0
    %228 = vmatpush1.msra.mxu0 0.0
    %229 = vmatprep.subr.mxu0 0.0
    %230 = vmatpush1.msra.mxu0 0.0
    %231 = vmatprep.subr.mxu0 0.0
    %232 = vmatpush1.msra.mxu0 0.0
    %233 = vmatprep.subr.mxu0 0.0
    %234 = vmatpush1.msra.mxu0 0.0
    %235 = vmatprep.subr.mxu0 0.0
    %236 = vmatpush1.msra.mxu0 0.0
    %237 = vmatprep.subr.mxu0 0.0
    %238 = vmatpush1.msra.mxu0 0.0
    %239 = vmatprep.subr.mxu0 0.0
    %240 = vmatpush1.msra.mxu0 0.0
    %241 = vmatprep.subr.mxu0 0.0
    %242 = vmatpush1.msra.mxu0 0.0
    %243 = vmatprep.subr.mxu0 0.0
    %244 = vmatpush1.msra.mxu0 0.0
    %245 = vmatprep.subr.mxu0 0.0
    %246 = vmatpush1.msra.mxu0 0.0
    %247 = vmatprep.subr.mxu0 0.0
    %248 = vmatpush1.msra.mxu0 0.0
    %249 = vmatprep.subr.mxu0 0.0
    %250 = vmatpush1.msra.mxu0 %v46
    %251 = vmatprep.subr.mxu0 0.0
    %252 = vmatpush1.msra.mxu0 %v43
    %253 = vmatprep.subr.mxu0 0.0
    %254 = vmatpush2.msra.mxu0 0.0
    %255 = vmatprep.subr.mxu0 0.0
    %256 = vmatpush2.msra.mxu0 0.0
    %257 = vmatprep.subr.mxu0 0.0
    %258 = vmatpush2.msra.mxu0 0.0
    %259 = vmatprep.subr.mxu0 0.0
    %260 = vmatpush2.msra.mxu0 0.0
    %261 = vmatprep.subr.mxu0 0.0
    %262 = vmatpush2.msra.mxu0 0.0
    %263 = vmatprep.subr.mxu0 0.0
    %264 = vmatpush2.msra.mxu0 0.0
    %265 = vmatprep.subr.mxu0 0.0
    %266 = vmatpush2.msra.mxu0 0.0
    %267 = vmatprep.subr.mxu0 0.0
    %268 = vmatpush2.msra.mxu0 0.0
    %269 = vmatprep.subr.mxu0 0.0
    %270 = vmatpush2.msra.mxu0 0.0
    %271 = vmatprep.subr.mxu0 0.0
    %272 = vmatpush2.msra.mxu0 0.0
    %273 = vmatprep.subr.mxu0 0.0
    %274 = vmatpush2.msra.mxu0 0.0
    %275 = vmatprep.subr.mxu0 0.0
    %276 = vmatpush2.msra.mxu0 0.0
    %277 = vmatprep.subr.mxu0 0.0
    %278 = vmatpush2.msra.mxu0 0.0
    %279 = vmatprep.subr.mxu0 0.0
    %280 = vmatpush2.msra.mxu0 0.0
    %281 = vmatprep.subr.mxu0 0.0
    %282 = vmatpush2.msra.mxu0 0.0
    %283 = vmatprep.subr.mxu0 0.0
    %284 = vmatpush2.msra.mxu0 0.0
    %285 = vmatprep.mubr.f32.mxu0 0.0
    %286 = vmatmul.mubr.f32.gmra.mxu0 %v148
    %v287 = vpop.f32.mrf.mxu0
    %v288 = vadd.f32 %v142, %v287
    %v289 = vpop.f32.mrf.mxu0
    %290 = vdwg.mxu0
    %291 = vst [vmem:[#allocation5] sm:$0xff] %v217
    %292 = vst [vmem:[#allocation5 + $0x8] sm:$0xff] %v219
    %293 = vst.msk [vmem:[#allocation6] sm:$0xff] %vm146, %v288
    // Predicated region
    $region26: #{tpu_custom_call.1} parent=1 // pred_check
      _
    $region27: #{tpu_custom_call.1} parent=1 // pred_check_branch
      %295 = sbr.rel (0) target = $region29
    $region28: #{tpu_custom_call.1} parent=1 // pred_region
      %s297 = ssub.s32 256, 256
      %298 = vsyncadd [#allocation4], %s297
      %s300 = sshll.u32 [#allocation5], 4
      %s301 = int_to_ptr.vmem [resolvable:$true] %s300
      %303 = dma.vmem_to_hbm [thread:$0]  %s301, 256, %s5, [#allocation4]
    $region29: #{tpu_custom_call.1} parent=1 // pred_fallthru
      _
    // Predicated region
    $region30: #{tpu_custom_call.1} parent=1 // pred_check
      _
    $region31: #{tpu_custom_call.1} parent=1 // pred_check_branch
      %305 = sbr.rel (0) target = $region33
    $region32: #{tpu_custom_call.1} parent=1 // pred_region
      %s307 = ssub.s32 128, 128
      %308 = vsyncadd [#allocation7], %s307
      %s310 = sshll.u32 [#allocation6], 4
      %s311 = int_to_ptr.vmem [resolvable:$true] %s310
      %313 = dma.vmem_to_hbm [thread:$0]  %s311, 128, %s6, [#allocation7]
    $region33: #{tpu_custom_call.1} parent=1 // pred_fallthru
      _
    // Predicated region
    $region34: #{tpu_custom_call.1} parent=1 // pred_check
      _
    $region35: #{tpu_custom_call.1} parent=1 // pred_check_branch
      %315 = sbr.rel (0) target = $region37
    $region36: #{tpu_custom_call.1} parent=1 // pred_region
      %316 = dma.done [#allocation4], 256
    $region37: #{tpu_custom_call.1} parent=1 // pred_fallthru
      _
    // Predicated region
    $region38: #{tpu_custom_call.1} parent=1 // pred_check
      _
    $region39: #{tpu_custom_call.1} parent=1 // pred_check_branch
      %318 = sbr.rel (0) target = $region41
    $region40: #{tpu_custom_call.1} parent=1 // pred_region
      %319 = dma.done [#allocation7], 128
    $region41: #{tpu_custom_call.1} parent=1 // pred_fallthru
      _
    %320 = vsyncpa [#allocation3], 1
    %321 = vsyncpa [#allocation4], 1
    %322 = vsyncpa [#allocation7], 1

</llo_original>
